<compile_context>
chip_gen: v6e
topology: v6e:2x2x1
jax: 0.10.0
libtpu: 0.0.40
codegen_flags: <defaults>
</compile_context>

<pallas_src>
import jax
import jax.numpy as jnp
from jax import lax
from jax.experimental import pallas as pl
from jax.experimental.pallas import tpu as pltpu

D_IN, D_H1, D_H2, D_OUT = 13, 50, 30, 15
D_OUT_PAD = 16  # layer-3 output rows padded to a sublane multiple


def _sigmoid(z):
    # sigmoid(z) == 0.5 * tanh(0.5 * z) + 0.5 : a single EUP transcendental
    # (tanh) instead of exp + reciprocal -> ~halves work on the EUP slot.
    return 0.5 * jnp.tanh(0.5 * z) + 0.5


def _mlp_kernel(x_ref, w1t_ref, b1_ref, w2t_ref, b2_ref, w3t_ref, b3_ref, o_ref):
    """One batch tile of the MLP.

    x_ref : [TB, 13]  f32   (row-major, exactly as the caller stores it)
    wNt   : [out, in] bf16  (w3t zero-padded to 16 output rows)
    bN    : [out, 1]  f32
    o_ref : [TB, 15]  f32

    Interior math is feature-major ([features, TB]) so the batch sits on the
    128-wide lane axis (full VPU/EUP occupancy). The single layout change back
    to row-major happens on the small [16, TB] result (XLU), so the kernel
    emits the final [B, 15] layout with no wrapper-side transpose pass.
    """
    cdt = w1t_ref.dtype  # matmul-operand dtype (bf16)

    x = x_ref[...].astype(cdt)                                   # [TB, 13] bf16
    # Contract on x's last axis -> [50, TB]; no explicit transpose of x needed.
    z1 = lax.dot_general(w1t_ref[...], x, (((1,), (1,)), ((), ())),
                         preferred_element_type=jnp.float32)
    h1 = _sigmoid(z1 + b1_ref[...]).astype(cdt)                  # [50, TB] bf16

    z2 = jnp.dot(w2t_ref[...], h1, preferred_element_type=jnp.float32)
    h2 = _sigmoid(z2 + b2_ref[...]).astype(cdt)                  # [30, TB] bf16

    z3 = jnp.dot(w3t_ref[...], h2, preferred_element_type=jnp.float32)
    y = _sigmoid(z3 + b3_ref[...])                               # [16, TB] f32

    # In-kernel transpose (XLU, otherwise idle) + drop the padded row, then a
    # lane-masked store of the [TB, 15] tile (store slot has plenty of slack).
    o_ref[...] = jnp.transpose(y)[:, :D_OUT].astype(o_ref.dtype)


def my_model_forward(x, params, *, tb=8192, matmul_dtype=jnp.bfloat16):
    """Forward pass of myModel. x: any shape whose numel is divisible by 13."""
    w1, b1, w2, b2, w3, b3 = params

    # Row-major flatten (free for contiguous input) -- no HBM transpose pass.
    x2d = jnp.reshape(x, (-1, D_IN)).astype(jnp.float32)
    batch = x2d.shape[0]

    # Batch tile: a multiple of 128 (lane width), capped at `tb`; prefer >= 2
    # grid steps when the batch allows it so v7x's two TensorCores both work.
    batch_round = pl.cdiv(batch, 128) * 128
    tb_eff = max(128, (min(tb, batch_round) // 128) * 128)
    if batch_round >= 256:
        half = max(128, (pl.cdiv(batch_round, 2) // 128) * 128)
        tb_eff = min(tb_eff, half)
    n_tiles = pl.cdiv(batch, tb_eff)
    batch_pad = n_tiles * tb_eff

    # Pad only when needed (branch-free kernel; pad rows sliced away below).
    if batch_pad != batch:
        x2d = jnp.pad(x2d, ((0, batch_pad - batch), (0, 0)))

    # Weights as [out, in] bf16 (MXU operands); biases as [out, 1] f32 columns.
    # Layer 3 is zero-padded to 16 output rows (padded row discarded in-kernel).
    w1t = w1.T.astype(matmul_dtype)
    w2t = w2.T.astype(matmul_dtype)
    w3t = jnp.zeros((D_OUT_PAD, D_H2), matmul_dtype).at[:D_OUT].set(
        w3.T.astype(matmul_dtype))
    b1c = jnp.reshape(b1, (D_H1, 1)).astype(jnp.float32)
    b2c = jnp.reshape(b2, (D_H2, 1)).astype(jnp.float32)
    b3c = jnp.zeros((D_OUT_PAD, 1), jnp.float32).at[:D_OUT, 0].set(
        b3.astype(jnp.float32))

    def const_spec(shape):
        return pl.BlockSpec(shape, lambda i: (0, 0))

    flops = 2 * batch_pad * (D_IN * D_H1 + D_H1 * D_H2 + D_H2 * D_OUT_PAD)
    transcendentals = batch_pad * (D_H1 + D_H2 + D_OUT_PAD)
    bytes_accessed = (
        batch_pad * D_IN * 4                                       # x (f32)
        + (D_IN * D_H1 + D_H1 * D_H2 + D_H2 * D_OUT_PAD) * 2       # weights (bf16)
        + (D_H1 + D_H2 + D_OUT_PAD) * 4                            # biases (f32)
        + batch_pad * D_OUT * 4                                    # output (f32)
    )

    out = pl.pallas_call(
        _mlp_kernel,
        out_shape=jax.ShapeDtypeStruct((batch_pad, D_OUT), jnp.float32),
        grid=(n_tiles,),
        in_specs=[
            pl.BlockSpec((tb_eff, D_IN), lambda i: (i, 0)),        # x tile
            const_spec((D_H1, D_IN)), const_spec((D_H1, 1)),       # layer 1
            const_spec((D_H2, D_H1)), const_spec((D_H2, 1)),       # layer 2
            const_spec((D_OUT_PAD, D_H2)), const_spec((D_OUT_PAD, 1)),  # layer 3
        ],
        out_specs=pl.BlockSpec((tb_eff, D_OUT), lambda i: (i, 0)),
        compiler_params=pltpu.CompilerParams(
            dimension_semantics=("parallel",),
            vmem_limit_bytes=48 * 1024 * 1024,   # large tiles also fit v5e/v7x
        ),
        cost_estimate=pl.CostEstimate(
            flops=flops,
            transcendentals=transcendentals,
            bytes_accessed=bytes_accessed,
        ),
    )(x2d, w1t, b1c, w2t, b2c, w3t, b3c)

    if batch_pad != batch:
        out = out[:batch]
    return out                                                     # [B, 15] f32


def init_params(key):
    """Deterministic init mimicking nn.Linear's uniform(-1/sqrt(in), 1/sqrt(in))."""
    dims = [(D_IN, D_H1), (D_H1, D_H2), (D_H2, D_OUT)]
    params = []
    for i, (din, dout) in enumerate(dims):
        kw, kb = jax.random.split(jax.random.fold_in(key, i))
        bound = 1.0 / jnp.sqrt(jnp.float32(din))
        w = jax.random.uniform(kw, (din, dout), jnp.float32, -bound, bound)
        b = jax.random.uniform(kb, (dout,), jnp.float32, -bound, bound)
        params.extend([w, b])
    return tuple(params)


if __name__ == "__main__":
    key = jax.random.PRNGKey(0)
    kx, kp = jax.random.split(key)

    # Small input whose trailing view is (-1, 13): (2, 4, 13) -> 8 rows of 13.
    x = jax.random.normal(kx, (2, 4, 13), dtype=jnp.float32)
    params = init_params(kp)

    y = my_model_forward(x, params)
    jax.block_until_ready(y)
    assert y.shape == (8, 15)

    # Pure-JAX reference mirroring the kernel math (bf16 operands, f32 accum).
    w1, b1, w2, b2, w3, b3 = params

    def layer(h, w, b):
        z = jnp.dot(h.astype(jnp.bfloat16), w.astype(jnp.bfloat16),
                    preferred_element_type=jnp.float32) + b[None, :]
        return jax.nn.sigmoid(z)

    xr = x.reshape(-1, D_IN)
    y_ref = layer(layer(layer(xr, w1, b1), w2, b2), w3, b3)
    max_err = float(jnp.max(jnp.abs(y - y_ref)))
    assert jnp.allclose(y, y_ref, atol=1e-3, rtol=1e-3), max_err

    print("KERNEL_OK")
</pallas_src>

<mosaic_0001>
module attributes {stable_mosaic.version = 11 : i64} {
  func.func @_mlp_kernel(%arg0: i32, %arg1: memref<128x13xf32, #tpu.memory_space<vmem>>, %arg2: memref<50x13xbf16, #tpu.memory_space<vmem>>, %arg3: memref<50x1xf32, #tpu.memory_space<vmem>>, %arg4: memref<30x50xbf16, #tpu.memory_space<vmem>>, %arg5: memref<30x1xf32, #tpu.memory_space<vmem>>, %arg6: memref<16x30xbf16, #tpu.memory_space<vmem>>, %arg7: memref<16x1xf32, #tpu.memory_space<vmem>>, %arg8: memref<128x15xf32, #tpu.memory_space<vmem>>) attributes {dimension_semantics = [#tpu.dimension_semantics<parallel>], iteration_bounds = array<i64: 1>, scalar_prefetch = 0 : i64, scratch_operands = 0 : i64, tpu.core_type = #tpu.core_type<tc>, window_params = [{transform_indices = @transform_0, window_bounds = array<i64: 128, 13>}, {pipeline_mode = #tpu.pipeline_mode<synchronous>, transform_indices = @transform_1, window_bounds = array<i64: 50, 13>}, {pipeline_mode = #tpu.pipeline_mode<synchronous>, transform_indices = @transform_2, window_bounds = array<i64: 50, 1>}, {pipeline_mode = #tpu.pipeline_mode<synchronous>, transform_indices = @transform_3, window_bounds = array<i64: 30, 50>}, {pipeline_mode = #tpu.pipeline_mode<synchronous>, transform_indices = @transform_4, window_bounds = array<i64: 30, 1>}, {pipeline_mode = #tpu.pipeline_mode<synchronous>, transform_indices = @transform_5, window_bounds = array<i64: 16, 30>}, {pipeline_mode = #tpu.pipeline_mode<synchronous>, transform_indices = @transform_6, window_bounds = array<i64: 16, 1>}, {transform_indices = @transform_7, window_bounds = array<i64: 128, 15>}]} {
    %c0 = arith.constant 0 : index
    %c0_0 = arith.constant 0 : index
    %0 = vector.load %arg1[%c0, %c0_0] : memref<128x13xf32, #tpu.memory_space<vmem>>, vector<128x13xf32>
    %1 = arith.truncf %0 : vector<128x13xf32> to vector<128x13xbf16>
    %c0_1 = arith.constant 0 : index
    %c0_2 = arith.constant 0 : index
    %2 = vector.load %arg2[%c0_1, %c0_2] : memref<50x13xbf16, #tpu.memory_space<vmem>>, vector<50x13xbf16>
    %cst = arith.constant dense<0.000000e+00> : vector<50x128xf32>
    %3 = tpu.matmul %2, %1, %cst {dimension_numbers = #tpu.dot_dimension_numbers<[1], [1], [0], [0], [0, 0, 1, 0], [], []>} : vector<50x13xbf16>, vector<128x13xbf16>, vector<50x128xf32> -> vector<50x128xf32>
    %c0_3 = arith.constant 0 : index
    %c0_4 = arith.constant 0 : index
    %4 = vector.load %arg3[%c0_3, %c0_4] : memref<50x1xf32, #tpu.memory_space<vmem>>, vector<50x1xf32>
    %5 = vector.broadcast %4 : vector<50x1xf32> to vector<50x128xf32>
    %6 = arith.addf %3, %5 : vector<50x128xf32>
    %cst_5 = arith.constant 5.000000e-01 : f32
    %7 = vector.broadcast %cst_5 : f32 to vector<50x128xf32>
    %8 = arith.mulf %7, %6 : vector<50x128xf32>
    %9 = math.tanh %8 : vector<50x128xf32>
    %cst_6 = arith.constant 5.000000e-01 : f32
    %10 = vector.broadcast %cst_6 : f32 to vector<50x128xf32>
    %11 = arith.mulf %10, %9 : vector<50x128xf32>
    %cst_7 = arith.constant 5.000000e-01 : f32
    %12 = vector.broadcast %cst_7 : f32 to vector<50x128xf32>
    %13 = arith.addf %11, %12 : vector<50x128xf32>
    %14 = arith.truncf %13 : vector<50x128xf32> to vector<50x128xbf16>
    %c0_8 = arith.constant 0 : index
    %c0_9 = arith.constant 0 : index
    %15 = vector.load %arg4[%c0_8, %c0_9] : memref<30x50xbf16, #tpu.memory_space<vmem>>, vector<30x50xbf16>
    %cst_10 = arith.constant dense<0.000000e+00> : vector<30x128xf32>
    %16 = tpu.matmul %15, %14, %cst_10 {dimension_numbers = #tpu.dot_dimension_numbers<[1], [0], [0], [1], [0, 0, 1, 1], [], []>} : vector<30x50xbf16>, vector<50x128xbf16>, vector<30x128xf32> -> vector<30x128xf32>
    %c0_11 = arith.constant 0 : index
    %c0_12 = arith.constant 0 : index
    %17 = vector.load %arg5[%c0_11, %c0_12] : memref<30x1xf32, #tpu.memory_space<vmem>>, vector<30x1xf32>
    %18 = vector.broadcast %17 : vector<30x1xf32> to vector<30x128xf32>
    %19 = arith.addf %16, %18 : vector<30x128xf32>
    %cst_13 = arith.constant 5.000000e-01 : f32
    %20 = vector.broadcast %cst_13 : f32 to vector<30x128xf32>
    %21 = arith.mulf %20, %19 : vector<30x128xf32>
    %22 = math.tanh %21 : vector<30x128xf32>
    %cst_14 = arith.constant 5.000000e-01 : f32
    %23 = vector.broadcast %cst_14 : f32 to vector<30x128xf32>
    %24 = arith.mulf %23, %22 : vector<30x128xf32>
    %cst_15 = arith.constant 5.000000e-01 : f32
    %25 = vector.broadcast %cst_15 : f32 to vector<30x128xf32>
    %26 = arith.addf %24, %25 : vector<30x128xf32>
    %27 = arith.truncf %26 : vector<30x128xf32> to vector<30x128xbf16>
    %c0_16 = arith.constant 0 : index
    %c0_17 = arith.constant 0 : index
    %28 = vector.load %arg6[%c0_16, %c0_17] : memref<16x30xbf16, #tpu.memory_space<vmem>>, vector<16x30xbf16>
    %cst_18 = arith.constant dense<0.000000e+00> : vector<16x128xf32>
    %29 = tpu.matmul %28, %27, %cst_18 {dimension_numbers = #tpu.dot_dimension_numbers<[1], [0], [0], [1], [0, 0, 1, 1], [], []>} : vector<16x30xbf16>, vector<30x128xbf16>, vector<16x128xf32> -> vector<16x128xf32>
    %c0_19 = arith.constant 0 : index
    %c0_20 = arith.constant 0 : index
    %30 = vector.load %arg7[%c0_19, %c0_20] : memref<16x1xf32, #tpu.memory_space<vmem>>, vector<16x1xf32>
    %31 = vector.broadcast %30 : vector<16x1xf32> to vector<16x128xf32>
    %32 = arith.addf %29, %31 : vector<16x128xf32>
    %cst_21 = arith.constant 5.000000e-01 : f32
    %33 = vector.broadcast %cst_21 : f32 to vector<16x128xf32>
    %34 = arith.mulf %33, %32 : vector<16x128xf32>
    %35 = math.tanh %34 : vector<16x128xf32>
    %cst_22 = arith.constant 5.000000e-01 : f32
    %36 = vector.broadcast %cst_22 : f32 to vector<16x128xf32>
    %37 = arith.mulf %36, %35 : vector<16x128xf32>
    %cst_23 = arith.constant 5.000000e-01 : f32
    %38 = vector.broadcast %cst_23 : f32 to vector<16x128xf32>
    %39 = arith.addf %37, %38 : vector<16x128xf32>
    %40 = tpu.transpose %39, [1, 0] : vector<16x128xf32> -> vector<128x16xf32>
    %41 = vector.extract_strided_slice %40 {offsets = [0, 0], sizes = [128, 15], strides = [1, 1]} : vector<128x16xf32> to vector<128x15xf32>
    %c0_24 = arith.constant 0 : index
    %c0_25 = arith.constant 0 : index
    %42 = vector.load %arg8[%c0_24, %c0_25] : memref<128x15xf32, #tpu.memory_space<vmem>>, vector<128x15xf32>
    tpu.vector_store %arg8[%c0_24, %c0_25], %41 {strides = array<i32>} : memref<128x15xf32, #tpu.memory_space<vmem>>, vector<128x15xf32>,
    return
  }
  func.func @transform_0(%arg0: i32) -> (i32, i32) {
    %c0_i32 = arith.constant 0 : i32
    %c0_i32_0 = arith.constant 0 : i32
    return %arg0, %c0_i32 : i32, i32
  }
  func.func @transform_1(%arg0: i32) -> (i32, i32) {
    %c0_i32 = arith.constant 0 : i32
    %c0_i32_0 = arith.constant 0 : i32
    %c0_i32_1 = arith.constant 0 : i32
    return %c0_i32, %c0_i32_0 : i32, i32
  }
  func.func @transform_2(%arg0: i32) -> (i32, i32) {
    %c0_i32 = arith.constant 0 : i32
    %c0_i32_0 = arith.constant 0 : i32
    %c0_i32_1 = arith.constant 0 : i32
    return %c0_i32, %c0_i32_0 : i32, i32
  }
  func.func @transform_3(%arg0: i32) -> (i32, i32) {
    %c0_i32 = arith.constant 0 : i32
    %c0_i32_0 = arith.constant 0 : i32
    %c0_i32_1 = arith.constant 0 : i32
    return %c0_i32, %c0_i32_0 : i32, i32
  }
  func.func @transform_4(%arg0: i32) -> (i32, i32) {
    %c0_i32 = arith.constant 0 : i32
    %c0_i32_0 = arith.constant 0 : i32
    %c0_i32_1 = arith.constant 0 : i32
    return %c0_i32, %c0_i32_0 : i32, i32
  }
  func.func @transform_5(%arg0: i32) -> (i32, i32) {
    %c0_i32 = arith.constant 0 : i32
    %c0_i32_0 = arith.constant 0 : i32
    %c0_i32_1 = arith.constant 0 : i32
    return %c0_i32, %c0_i32_0 : i32, i32
  }
  func.func @transform_6(%arg0: i32) -> (i32, i32) {
    %c0_i32 = arith.constant 0 : i32
    %c0_i32_0 = arith.constant 0 : i32
    %c0_i32_1 = arith.constant 0 : i32
    return %c0_i32, %c0_i32_0 : i32, i32
  }
  func.func @transform_7(%arg0: i32) -> (i32, i32) {
    %c0_i32 = arith.constant 0 : i32
    %c0_i32_0 = arith.constant 0 : i32
    return %arg0, %c0_i32 : i32, i32
  }
}

</mosaic_0001>

<llo_original>
// kernel: tpu_custom_call.1
$region0: #{tpu_custom_call.1}
  #allocation0 [shape = 'u32[]', space=smem, size = 0x4, offset = 0x4, fixed_abs, tag = 'smem constant byte address 0x4 - core index']
  #allocation1 [shape = 'u32[144,128]{1,0:T(1,128)}', space=vmem, size = 0x12000, scoped, tag = 'internal scratch']
  %s0 = inlined_call_operand.vmem [shape: f32[128,13], index: 0, kind: input, shape index: {}]
  %s1 = inlined_call_operand.vmem [shape: bf16[50,13], index: 1, kind: input, shape index: {}]
  %s2 = inlined_call_operand.vmem [shape: f32[50,1], index: 2, kind: input, shape index: {}]
  %s3 = inlined_call_operand.vmem [shape: bf16[30,50], index: 3, kind: input, shape index: {}]
  %s4 = inlined_call_operand.vmem [shape: f32[30,1], index: 4, kind: input, shape index: {}]
  %s5 = inlined_call_operand.vmem [shape: bf16[16,30], index: 5, kind: input, shape index: {}]
  %s6 = inlined_call_operand.vmem [shape: f32[16,1], index: 6, kind: input, shape index: {}]
  %s7 = inlined_call_operand.vmem [shape: f32[128,15], index: 7, kind: output, shape index: {}]
  %s8 = sld [smem:[#allocation0]]
  $region38: #{tpu_custom_call.1} parent=0
    _
  %s10 = ssub.s32 1, %s8
  %s11 = scalar_select 0, %s10, %s8
  // Predicated region
  $region2: #{tpu_custom_call.1} parent=0 // pred_check
    _
  $region3: #{tpu_custom_call.1} parent=0 // pred_check_branch
    %13 = sbr.rel (0) target = $region5
  $region4: #{tpu_custom_call.1} parent=0 // pred_region
    _
  $region5: #{tpu_custom_call.1} parent=0 // pred_fallthru
    _
  // Predicated region
  $region6: #{tpu_custom_call.1} parent=0 // pred_check
    _
  $region7: #{tpu_custom_call.1} parent=0 // pred_check_branch
    %15 = sbr.rel (0) target = $region9
  $region8: #{tpu_custom_call.1} parent=0 // pred_region
    _
  $region9: #{tpu_custom_call.1} parent=0 // pred_fallthru
    _
  // Predicated region
  $region10: #{tpu_custom_call.1} parent=0 // pred_check
    _
  $region11: #{tpu_custom_call.1} parent=0 // pred_check_branch
    %17 = sbr.rel (0) target = $region13
  $region12: #{tpu_custom_call.1} parent=0 // pred_region
    _
  $region13: #{tpu_custom_call.1} parent=0 // pred_fallthru
    _
  // Predicated region
  $region14: #{tpu_custom_call.1} parent=0 // pred_check
    _
  $region15: #{tpu_custom_call.1} parent=0 // pred_check_branch
    %19 = sbr.rel (0) target = $region17
  $region16: #{tpu_custom_call.1} parent=0 // pred_region
    _
  $region17: #{tpu_custom_call.1} parent=0 // pred_fallthru
    _
  // Predicated region
  $region18: #{tpu_custom_call.1} parent=0 // pred_check
    _
  $region19: #{tpu_custom_call.1} parent=0 // pred_check_branch
    %21 = sbr.rel (0) target = $region21
  $region20: #{tpu_custom_call.1} parent=0 // pred_region
    _
  $region21: #{tpu_custom_call.1} parent=0 // pred_fallthru
    _
  // Predicated region
  $region22: #{tpu_custom_call.1} parent=0 // pred_check
    _
  $region23: #{tpu_custom_call.1} parent=0 // pred_check_branch
    %23 = sbr.rel (0) target = $region25
  $region24: #{tpu_custom_call.1} parent=0 // pred_region
    _
  $region25: #{tpu_custom_call.1} parent=0 // pred_fallthru
    _
  // Predicated region
  $region26: #{tpu_custom_call.1} parent=0 // pred_check
    _
  $region27: #{tpu_custom_call.1} parent=0 // pred_check_branch
    %25 = sbr.rel (0) target = $region29
  $region28: #{tpu_custom_call.1} parent=0 // pred_region
    _
  $region29: #{tpu_custom_call.1} parent=0 // pred_fallthru
    _
  %v27 = vld [vmem:[%s0] sm:$0xff]
  %v28 = vld [vmem:[%s0 + $0x8] sm:$0xff]
  %v29 = vld [vmem:[%s0 + $0x10] sm:$0xff]
  %v30 = vld [vmem:[%s0 + $0x18] sm:$0xff]
  %v31 = vld [vmem:[%s0 + $0x20] sm:$0xff]
  %v32 = vld [vmem:[%s0 + $0x28] sm:$0xff]
  %v33 = vld [vmem:[%s0 + $0x30] sm:$0xff]
  %v34 = vld [vmem:[%s0 + $0x38] sm:$0xff]
  %v35 = vld [vmem:[%s0 + $0x40] sm:$0xff]
  %v36 = vld [vmem:[%s0 + $0x48] sm:$0xff]
  %v37 = vld [vmem:[%s0 + $0x50] sm:$0xff]
  %v38 = vld [vmem:[%s0 + $0x58] sm:$0xff]
  %v39 = vld [vmem:[%s0 + $0x60] sm:$0xff]
  %v40 = vld [vmem:[%s0 + $0x68] sm:$0xff]
  %v41 = vld [vmem:[%s0 + $0x70] sm:$0xff]
  %v42 = vld [vmem:[%s0 + $0x78] sm:$0xff]
  %v43 = vpack.c.bf16 %v28, %v27
  %v44 = vpack.c.bf16 %v30, %v29
  %v45 = vpack.c.bf16 %v32, %v31
  %v46 = vpack.c.bf16 %v34, %v33
  %v47 = vpack.c.bf16 %v36, %v35
  %v48 = vpack.c.bf16 %v38, %v37
  %v49 = vpack.c.bf16 %v40, %v39
  %v50 = vpack.c.bf16 %v42, %v41
  %v51 = vld [vmem:[%s1] sm:$0xf]
  %v52 = vld [vmem:[%s1 + $0x4] sm:$0xf]
  %v53 = vld [vmem:[%s1 + $0x8] sm:$0xf]
  %v54 = vld [vmem:[%s1 + $0xc] sm:$0xf]
  %v55 = vld [vmem:[%s1 + $0x10] sm:$0xf]
  %v56 = vld [vmem:[%s1 + $0x14] sm:$0xf]
  %v57 = vld [vmem:[%s1 + $0x18] sm:$0x1]
  %v58 = vld [vmem:[%s2] sm:$0xff]
  %v59 = vld [vmem:[%s2 + $0x8] sm:$0xff]
  %v60 = vld [vmem:[%s2 + $0x10] sm:$0xff]
  %v61 = vld [vmem:[%s2 + $0x18] sm:$0xff]
  %v62 = vld [vmem:[%s2 + $0x20] sm:$0xff]
  %v63 = vld [vmem:[%s2 + $0x28] sm:$0xff]
  %v64 = vld [vmem:[%s2 + $0x30] sm:$0x3]
  %66 = vset.pattern.permute.xlu0 0
  %67 = vperm.xlu0 %66, %v58
  %v68 = vpop.permute.xlu0 %67
  %71 = vset.pattern.permute.xlu0 0
  %72 = vperm.xlu0 %71, %v59
  %v73 = vpop.permute.xlu0 %72
  %76 = vset.pattern.permute.xlu0 0
  %77 = vperm.xlu0 %76, %v60
  %v78 = vpop.permute.xlu0 %77
  %81 = vset.pattern.permute.xlu0 0
  %82 = vperm.xlu0 %81, %v61
  %v83 = vpop.permute.xlu0 %82
  %86 = vset.pattern.permute.xlu0 0
  %87 = vperm.xlu0 %86, %v62
  %v88 = vpop.permute.xlu0 %87
  %91 = vset.pattern.permute.xlu0 0
  %92 = vperm.xlu0 %91, %v63
  %v93 = vpop.permute.xlu0 %92
  %96 = vset.pattern.permute.xlu0 0
  %97 = vperm.xlu0 %96, %v64
  %v98 = vpop.permute.xlu0 %97
  %v107 = vunpack.c.l.b16 %v51
  %v108 = vunpack.c.l.b16 %v52
  %v109 = vunpack.c.l.b16 %v53
  %v110 = vunpack.c.l.b16 %v54
  %v111 = vunpack.c.l.b16 %v55
  %v112 = vunpack.c.l.b16 %v56
  %v113 = vunpack.c.l.b16 %v57
  %v114 = vpack.c.b16 %v108, %v107
  %v115 = vpack.c.b16 %v110, %v109
  %v116 = vpack.c.b16 %v112, %v111
  %v117 = vpack.c.b16 %v113, %v113
  %vm118 = vcmask 105472
  %v120 = vsel %vm118, %v114, 0
  %v123 = vsel %vm118, %v115, 0
  %v126 = vsel %vm118, %v116, 0
  %v129 = vsel %vm118, %v117, 0
  %v132 = vsel %vm118, %v43, 0
  %v135 = vsel %vm118, %v44, 0
  %v138 = vsel %vm118, %v45, 0
  %v141 = vsel %vm118, %v46, 0
  %v144 = vsel %vm118, %v47, 0
  %v147 = vsel %vm118, %v48, 0
  %v150 = vsel %vm118, %v49, 0
  %v153 = vsel %vm118, %v50, 0
  %155 = vmatprep.subr.bf16.mxu0 0
  %156 = vmatpush1.bf16.xpose.msra.mxu0 %v153
  %157 = vmatprep.subr.bf16.mxu0 0
  %158 = vmatpush1.bf16.xpose.msra.mxu0 %v150
  %159 = vmatprep.subr.bf16.mxu0 0
  %160 = vmatpush1.bf16.xpose.msra.mxu0 %v147
  %161 = vmatprep.subr.bf16.mxu0 0
  %162 = vmatpush1.bf16.xpose.msra.mxu0 %v144
  %163 = vmatprep.subr.bf16.mxu0 0
  %164 = vmatpush1.bf16.xpose.msra.mxu0 %v141
  %165 = vmatprep.subr.bf16.mxu0 0
  %166 = vmatpush1.bf16.xpose.msra.mxu0 %v138
  %167 = vmatprep.subr.bf16.mxu0 0
  %168 = vmatpush1.bf16.xpose.msra.mxu0 %v135
  %169 = vmatprep.subr.bf16.mxu0 0
  %170 = vmatpush1.bf16.xpose.msra.mxu0 %v132
  %171 = vmatprep.subr.bf16.mxu0 0
  %172 = vmatpush2.bf16.xpose.msra.mxu0 0
  %173 = vmatprep.subr.bf16.mxu0 0
  %174 = vmatpush2.bf16.xpose.msra.mxu0 0
  %175 = vmatprep.subr.bf16.mxu0 0
  %176 = vmatpush2.bf16.xpose.msra.mxu0 0
  %177 = vmatprep.subr.bf16.mxu0 0
  %178 = vmatpush2.bf16.xpose.msra.mxu0 0
  %179 = vmatprep.subr.bf16.mxu0 0
  %180 = vmatpush2.bf16.xpose.msra.mxu0 0
  %181 = vmatprep.subr.bf16.mxu0 0
  %182 = vmatpush2.bf16.xpose.msra.mxu0 0
  %183 = vmatprep.subr.bf16.mxu0 0
  %184 = vmatpush2.bf16.xpose.msra.mxu0 0
  %185 = vmatprep.subr.bf16.mxu0 0
  %186 = vmatpush2.bf16.xpose.msra.mxu0 0
  %187 = vmatprep.mubr.bf16.mxu0 0
  %188 = vmatmul.mubr.bf16.gmra.mxu0 %v120
  %v189 = vpop.f32.mrf.mxu0
  %v190 = vadd.f32 %v68, %v189
  %v191 = vpop.f32.mrf.mxu0
  %v192 = vpop.f32.mrf.mxu0
  %v193 = vadd.f32 %v73, %v192
  %v194 = vpop.f32.mrf.mxu0
  %195 = vmatprep.mubr.bf16.mxu0 0
  %196 = vmatmul.mubr.bf16.gmra.mxu0 %v123
  %v197 = vpop.f32.mrf.mxu0
  %v198 = vadd.f32 %v78, %v197
  %v199 = vpop.f32.mrf.mxu0
  %v200 = vpop.f32.mrf.mxu0
  %v201 = vadd.f32 %v83, %v200
  %v202 = vpop.f32.mrf.mxu0
  %203 = vmatprep.mubr.bf16.mxu0 0
  %204 = vmatmul.mubr.bf16.gmra.mxu0 %v126
  %v205 = vpop.f32.mrf.mxu0
  %v206 = vadd.f32 %v88, %v205
  %v207 = vpop.f32.mrf.mxu0
  %v208 = vpop.f32.mrf.mxu0
  %v209 = vadd.f32 %v93, %v208
  %v210 = vpop.f32.mrf.mxu0
  %211 = vmatprep.mubr.bf16.mxu0 0
  %212 = vmatmul.mubr.bf16.gmra.mxu0 %v129
  %v213 = vpop.f32.mrf.mxu0
  %v214 = vadd.f32 %v98, %v213
  %v215 = vpop.f32.mrf.mxu0
  %v216 = vpop.f32.mrf.mxu0
  %v217 = vpop.f32.mrf.mxu0
  %218 = vdwg.mxu0
  %v219 = vmul.f32 %v190, 0.5
  %v220 = vmul.f32 %v193, 0.5
  %v221 = vmul.f32 %v198, 0.5
  %v222 = vmul.f32 %v201, 0.5
  %v223 = vmul.f32 %v206, 0.5
  %v224 = vmul.f32 %v209, 0.5
  %v225 = vmul.f32 %v214, 0.5
  %v226 = vtanh.pop %v219
  %v227 = vtanh.pop %v220
  %v228 = vtanh.pop %v221
  %v229 = vtanh.pop %v222
  %v230 = vtanh.pop %v223
  %v231 = vtanh.pop %v224
  %v232 = vtanh.pop %v225
  %v233 = vmul.f32 %v226, 0.5
  %v234 = vmul.f32 %v227, 0.5
  %v235 = vmul.f32 %v228, 0.5
  %v236 = vmul.f32 %v229, 0.5
  %v237 = vmul.f32 %v230, 0.5
  %v238 = vmul.f32 %v231, 0.5
  %v239 = vmul.f32 %v232, 0.5
  %v240 = vadd.f32 %v233, 0.5
  %v241 = vadd.f32 %v234, 0.5
  %v242 = vadd.f32 %v235, 0.5
  %v243 = vadd.f32 %v236, 0.5
  %v244 = vadd.f32 %v237, 0.5
  %v245 = vadd.f32 %v238, 0.5
  %v246 = vadd.f32 %v239, 0.5
  %v247 = vpack.c.bf16 %v241, %v240
  %v248 = vpack.c.bf16 %v243, %v242
  %v249 = vpack.c.bf16 %v245, %v244
  %v250 = vpack.c.bf16 %v246, %v246
  %v251 = vld [vmem:[%s3] sm:$0xf]
  %v252 = vld [vmem:[%s3 + $0x4] sm:$0xf]
  %v253 = vld [vmem:[%s3 + $0x8] sm:$0xf]
  %v254 = vld [vmem:[%s3 + $0xc] sm:$0x7]
  %v255 = vld [vmem:[%s4] sm:$0xff]
  %v256 = vld [vmem:[%s4 + $0x8] sm:$0xff]
  %v257 = vld [vmem:[%s4 + $0x10] sm:$0xff]
  %v258 = vld [vmem:[%s4 + $0x18] sm:$0x3f]
  %260 = vset.pattern.permute.xlu0 0
  %261 = vperm.xlu0 %260, %v255
  %v262 = vpop.permute.xlu0 %261
  %265 = vset.pattern.permute.xlu0 0
  %266 = vperm.xlu0 %265, %v256
  %v267 = vpop.permute.xlu0 %266
  %270 = vset.pattern.permute.xlu0 0
  %271 = vperm.xlu0 %270, %v257
  %v272 = vpop.permute.xlu0 %271
  %275 = vset.pattern.permute.xlu0 0
  %276 = vperm.xlu0 %275, %v258
  %v277 = vpop.permute.xlu0 %276
  %v283 = vunpack.c.l.b16 %v251
  %v284 = vunpack.c.l.b16 %v252
  %v285 = vunpack.c.l.b16 %v253
  %v286 = vunpack.c.l.b16 %v254
  %v287 = vpack.c.b16 %v284, %v283
  %v288 = vpack.c.b16 %v286, %v285
  %vm289 = vcmask 408576
  %v291 = vsel %vm289, %v287, 0
  %v294 = vsel %vm289, %v288, 0
  %vm296 = vcmask 1040384
  %v298 = vsel %vm296, %v250, 0
  %300 = vmatprep.subr.bf16.mxu0 0
  %301 = vmatpush1.bf16.msra.mxu0 0
  %302 = vmatprep.subr.bf16.mxu0 0
  %303 = vmatpush1.bf16.msra.mxu0 0
  %304 = vmatprep.subr.bf16.mxu0 0
  %305 = vmatpush1.bf16.msra.mxu0 0
  %306 = vmatprep.subr.bf16.mxu0 0
  %307 = vmatpush1.bf16.msra.mxu0 0
  %308 = vmatprep.subr.bf16.mxu0 0
  %309 = vmatpush1.bf16.msra.mxu0 %v298
  %310 = vmatprep.subr.bf16.mxu0 0
  %311 = vmatpush1.bf16.msra.mxu0 %v249
  %312 = vmatprep.subr.bf16.mxu0 0
  %313 = vmatpush1.bf16.msra.mxu0 %v248
  %314 = vmatprep.subr.bf16.mxu0 0
  %315 = vmatpush1.bf16.msra.mxu0 %v247
  %316 = vmatprep.subr.bf16.mxu0 0
  %317 = vmatpush2.bf16.msra.mxu0 0
  %318 = vmatprep.subr.bf16.mxu0 0
  %319 = vmatpush2.bf16.msra.mxu0 0
  %320 = vmatprep.subr.bf16.mxu0 0
  %321 = vmatpush2.bf16.msra.mxu0 0
  %322 = vmatprep.subr.bf16.mxu0 0
  %323 = vmatpush2.bf16.msra.mxu0 0
  %324 = vmatprep.subr.bf16.mxu0 0
  %325 = vmatpush2.bf16.msra.mxu0 0
  %326 = vmatprep.subr.bf16.mxu0 0
  %327 = vmatpush2.bf16.msra.mxu0 0
  %328 = vmatprep.subr.bf16.mxu0 0
  %329 = vmatpush2.bf16.msra.mxu0 0
  %330 = vmatprep.subr.bf16.mxu0 0
  %331 = vmatpush2.bf16.msra.mxu0 0
  %332 = vmatprep.mubr.bf16.mxu0 0
  %333 = vmatmul.mubr.bf16.gmra.mxu0 %v291
  %v334 = vpop.f32.mrf.mxu0
  %v335 = vadd.f32 %v262, %v334
  %v336 = vpop.f32.mrf.mxu0
  %v337 = vpop.f32.mrf.mxu0
  %v338 = vadd.f32 %v267, %v337
  %v339 = vpop.f32.mrf.mxu0
  %340 = vmatprep.mubr.bf16.mxu0 0
  %341 = vmatmul.mubr.bf16.gmra.mxu0 %v294
  %v342 = vpop.f32.mrf.mxu0
  %v343 = vadd.f32 %v272, %v342
  %v344 = vpop.f32.mrf.mxu0
  %v345 = vpop.f32.mrf.mxu0
  %v346 = vadd.f32 %v277, %v345
  %v347 = vpop.f32.mrf.mxu0
  %348 = vdwg.mxu0
  %v349 = vmul.f32 %v335, 0.5
  %v350 = vmul.f32 %v338, 0.5
  %v351 = vmul.f32 %v343, 0.5
  %v352 = vmul.f32 %v346, 0.5
  %v353 = vtanh.pop %v349
  %v354 = vtanh.pop %v350
  %v355 = vtanh.pop %v351
  %v356 = vtanh.pop %v352
  %v357 = vmul.f32 %v353, 0.5
  %v358 = vmul.f32 %v354, 0.5
  %v359 = vmul.f32 %v355, 0.5
  %v360 = vmul.f32 %v356, 0.5
  %v361 = vadd.f32 %v357, 0.5
  %v362 = vadd.f32 %v358, 0.5
  %v363 = vadd.f32 %v359, 0.5
  %v364 = vadd.f32 %v360, 0.5
  %v365 = vpack.c.bf16 %v362, %v361
  %v366 = vpack.c.bf16 %v364, %v363
  %v367 = vld [vmem:[%s5] sm:$0xf]
  %v368 = vld [vmem:[%s5 + $0x4] sm:$0xf]
  %v369 = vld [vmem:[%s6] sm:$0xff]
  %v370 = vld [vmem:[%s6 + $0x8] sm:$0xff]
  %372 = vset.pattern.permute.xlu0 0
  %373 = vperm.xlu0 %372, %v369
  %v374 = vpop.permute.xlu0 %373
  %377 = vset.pattern.permute.xlu0 0
  %378 = vperm.xlu0 %377, %v370
  %v379 = vpop.permute.xlu0 %378
  %v383 = vunpack.c.l.b16 %v367
  %v384 = vunpack.c.l.b16 %v368
  %v385 = vpack.c.b16 %v384, %v383
  %vm386 = vcmask 244736
  %v388 = vsel %vm386, %v385, 0
  %vm390 = vcmask 1046528
  %v392 = vsel %vm390, %v366, 0
  %394 = vmatprep.subr.bf16.mxu0 0
  %395 = vmatpush1.bf16.msra.mxu0 0
  %396 = vmatprep.subr.bf16.mxu0 0
  %397 = vmatpush1.bf16.msra.mxu0 0
  %398 = vmatprep.subr.bf16.mxu0 0
  %399 = vmatpush1.bf16.msra.mxu0 0
  %400 = vmatprep.subr.bf16.mxu0 0
  %401 = vmatpush1.bf16.msra.mxu0 0
  %402 = vmatprep.subr.bf16.mxu0 0
  %403 = vmatpush1.bf16.msra.mxu0 0
  %404 = vmatprep.subr.bf16.mxu0 0
  %405 = vmatpush1.bf16.msra.mxu0 0
  %406 = vmatprep.subr.bf16.mxu0 0
  %407 = vmatpush1.bf16.msra.mxu0 %v392
  %408 = vmatprep.subr.bf16.mxu0 0
  %409 = vmatpush1.bf16.msra.mxu0 %v365
  %410 = vmatprep.subr.bf16.mxu0 0
  %411 = vmatpush2.bf16.msra.mxu0 0
  %412 = vmatprep.subr.bf16.mxu0 0
  %413 = vmatpush2.bf16.msra.mxu0 0
  %414 = vmatprep.subr.bf16.mxu0 0
  %415 = vmatpush2.bf16.msra.mxu0 0
  %416 = vmatprep.subr.bf16.mxu0 0
  %417 = vmatpush2.bf16.msra.mxu0 0
  %418 = vmatprep.subr.bf16.mxu0 0
  %419 = vmatpush2.bf16.msra.mxu0 0
  %420 = vmatprep.subr.bf16.mxu0 0
  %421 = vmatpush2.bf16.msra.mxu0 0
  %422 = vmatprep.subr.bf16.mxu0 0
  %423 = vmatpush2.bf16.msra.mxu0 0
  %424 = vmatprep.subr.bf16.mxu0 0
  %425 = vmatpush2.bf16.msra.mxu0 0
  %426 = vmatprep.mubr.bf16.mxu0 0
  %427 = vmatmul.mubr.bf16.gmra.mxu0 %v388
  %v428 = vpop.f32.mrf.mxu0
  %v429 = vadd.f32 %v374, %v428
  %v430 = vpop.f32.mrf.mxu0
  %v431 = vpop.f32.mrf.mxu0
  %v432 = vadd.f32 %v379, %v431
  %v433 = vpop.f32.mrf.mxu0
  %434 = vdwg.mxu0
  %v435 = vmul.f32 %v429, 0.5
  %v436 = vmul.f32 %v432, 0.5
  %v437 = vtanh.pop %v435
  %v438 = vtanh.pop %v436
  %v439 = vmul.f32 %v437, 0.5
  %v440 = vmul.f32 %v438, 0.5
  %v441 = vadd.f32 %v439, 0.5
  %v442 = vadd.f32 %v440, 0.5
  %443 = vxpose.xlu0.b32.start [1/16] %v441, 128
  %444 = vxpose.xlu0.b32.cont [2/16] %v442, 128
  %445 = vxpose.xlu0.b32.cont [3/16] 0.0, 128
  %446 = vxpose.xlu0.b32.cont [4/16] 0.0, 128
  %447 = vxpose.xlu0.b32.cont [5/16] 0.0, 128
  %448 = vxpose.xlu0.b32.cont [6/16] 0.0, 128
  %449 = vxpose.xlu0.b32.cont [7/16] 0.0, 128
  %450 = vxpose.xlu0.b32.cont [8/16] 0.0, 128
  %451 = vxpose.xlu0.b32.cont [9/16] 0.0, 128
  %452 = vxpose.xlu0.b32.cont [10/16] 0.0, 128
  %453 = vxpose.xlu0.b32.cont [11/16] 0.0, 128
  %454 = vxpose.xlu0.b32.cont [12/16] 0.0, 128
  %455 = vxpose.xlu0.b32.cont [13/16] 0.0, 128
  %456 = vxpose.xlu0.b32.cont [14/16] 0.0, 128
  %457 = vxpose.xlu0.b32.cont [15/16] 0.0, 128
  %458 = vxpose.xlu0.b32.end [16/16] 0.0, 128
  %v459 = vpop.trf.xlu0
  %v460 = vpop.trf.xlu0
  %v461 = vpop.trf.xlu0
  %v462 = vpop.trf.xlu0
  %v463 = vpop.trf.xlu0
  %v464 = vpop.trf.xlu0
  %v465 = vpop.trf.xlu0
  %v466 = vpop.trf.xlu0
  %v467 = vpop.trf.xlu0
  %v468 = vpop.trf.xlu0
  %v469 = vpop.trf.xlu0
  %v470 = vpop.trf.xlu0
  %v471 = vpop.trf.xlu0
  %v472 = vpop.trf.xlu0
  %v473 = vpop.trf.xlu0
  %v474 = vpop.trf.xlu0
  %vm475 = vcmask 121856
  %476 = vst.msk [vmem:[%s7] sm:$0xff] %vm475, %v459
  %477 = vst.msk [vmem:[%s7 + $0x8] sm:$0xff] %vm475, %v460
  %478 = vst.msk [vmem:[%s7 + $0x10] sm:$0xff] %vm475, %v461
  %479 = vst.msk [vmem:[%s7 + $0x18] sm:$0xff] %vm475, %v462
  %480 = vst.msk [vmem:[%s7 + $0x20] sm:$0xff] %vm475, %v463
  %481 = vst.msk [vmem:[%s7 + $0x28] sm:$0xff] %vm475, %v464
  %482 = vst.msk [vmem:[%s7 + $0x30] sm:$0xff] %vm475, %v465
  %483 = vst.msk [vmem:[%s7 + $0x38] sm:$0xff] %vm475, %v466
  %484 = vst.msk [vmem:[%s7 + $0x40] sm:$0xff] %vm475, %v467
  %485 = vst.msk [vmem:[%s7 + $0x48] sm:$0xff] %vm475, %v468
  %486 = vst.msk [vmem:[%s7 + $0x50] sm:$0xff] %vm475, %v469
  %487 = vst.msk [vmem:[%s7 + $0x58] sm:$0xff] %vm475, %v470
  %488 = vst.msk [vmem:[%s7 + $0x60] sm:$0xff] %vm475, %v471
  %489 = vst.msk [vmem:[%s7 + $0x68] sm:$0xff] %vm475, %v472
  %490 = vst.msk [vmem:[%s7 + $0x70] sm:$0xff] %vm475, %v473
  %491 = vst.msk [vmem:[%s7 + $0x78] sm:$0xff] %vm475, %v474
  // Predicated region
  $region30: #{tpu_custom_call.1} parent=0 // pred_check
    _
  $region31: #{tpu_custom_call.1} parent=0 // pred_check_branch
    %493 = sbr.rel (0) target = $region33
  $region32: #{tpu_custom_call.1} parent=0 // pred_region
    _
  $region33: #{tpu_custom_call.1} parent=0 // pred_fallthru
    _
  // Predicated region
  $region34: #{tpu_custom_call.1} parent=0 // pred_check
    _
  $region35: #{tpu_custom_call.1} parent=0 // pred_check_branch
    %495 = sbr.rel (0) target = $region37
  $region36: #{tpu_custom_call.1} parent=0 // pred_region
    _
  $region37: #{tpu_custom_call.1} parent=0 // pred_fallthru
    _

</llo_original>
